<compile_context>
chip_gen: v7x
topology: tpu7x:2x2x1
jax: 0.10.0
libtpu: 0.0.40
codegen_flags: <defaults>
</compile_context>

<pallas_src>
import jax
import jax.numpy as jnp
from jax.experimental import pallas as pl
from jax.experimental.pallas import tpu as pltpu


def _copy_kernel(x_ref, o_ref):
    # TODO(synk): ModelBase.forward is abstract (raises NotImplementedError);
    # only a pass-through is implementable. Subclasses define the real compute.
    o_ref[...] = x_ref[...]


# ~2 MiB per tile -> 2 arrays x 2 pipeline buffers = 8 MiB of VMEM, comfortably
# under the scoped-VMEM defaults on v5e (16 MiB) / v6e / v7x (32 MiB) while big
# enough to amortize the ~0.35 us per-grid-step overhead (measured ~85% of HBM
# roofline at this tile scale for mem-bound copies).
_TARGET_TILE_BYTES = 2 * 1024 * 1024
_LANE_CANDIDATES = (4096, 2048, 1024, 512, 256, 128)  # lane-dense last dims


def _pallas_identity_copy(x: jax.Array) -> jax.Array:
    """Materialized identity copy as a tiled, lane-dense Pallas TPU kernel."""
    total = x.size
    lanes = next((l for l in _LANE_CANDIDATES if total and total % l == 0), None)

    if lanes is None:
        # Element count has no multiple-of-128 factorization: fall back to a
        # single whole-array VMEM-resident block (fine for small inputs).
        return pl.pallas_call(
            _copy_kernel,
            out_shape=jax.ShapeDtypeStruct(x.shape, x.dtype),
            in_specs=[pl.BlockSpec(memory_space=pltpu.VMEM)],
            out_specs=pl.BlockSpec(memory_space=pltpu.VMEM),
        )(x)

    # Flatten to a lane-dense 2D slab: last dim is a large multiple of 128 so
    # stores are full-width vst (no masked vst.msk partial stores).
    rows = total // lanes
    itemsize = jnp.dtype(x.dtype).itemsize
    rows_per_tile = max(1, _TARGET_TILE_BYTES // (lanes * itemsize))
    if rows_per_tile >= rows:
        tm = rows                                  # single step, full extent
    else:
        tm = max(8, (rows_per_tile // 8) * 8)      # sublane rule: multiple of 8

    x2d = x.reshape(rows, lanes)
    grid = (pl.cdiv(rows, tm),)

    y2d = pl.pallas_call(
        _copy_kernel,
        out_shape=jax.ShapeDtypeStruct((rows, lanes), x.dtype),
        grid=grid,
        in_specs=[pl.BlockSpec((tm, lanes), lambda i: (i, 0))],
        out_specs=pl.BlockSpec((tm, lanes), lambda i: (i, 0)),
        compiler_params=pltpu.CompilerParams(
            # Copy iterations are independent: lets Mosaic shard the grid
            # across both TensorCores on v7x; harmless no-op on v5e/v6e.
            dimension_semantics=("parallel",)),
    )(x2d)
    return y2d.reshape(x.shape)


def model_base_forward(x: jax.Array, materialize: bool = True) -> jax.Array:
    """Pass-through 'forward' of ModelBase.

    The true optimum for an identity is to not touch HBM at all, i.e. return
    the input (materialize=False).  materialize=True routes the pass-through
    through the tiled Pallas copy kernel (exercised in the demo below).
    """
    if not materialize:
        return x  # zero HBM traffic — recommended path for identity semantics
    return _pallas_identity_copy(x)


def trainable_parameters(params: dict):
    """ModelBase defines no parameters of its own; mirrors the (empty) generator."""
    for name, p in params.items():
        yield name, p


if __name__ == "__main__":
    key = jax.random.PRNGKey(0)

    # Small NCHW input consistent with a generic model input.
    x = jax.random.normal(key, (2, 4, 16, 16), dtype=jnp.float32)

    # Materialized (Pallas) pass-through.
    y = jax.block_until_ready(model_base_forward(x))
    assert y.shape == x.shape and y.dtype == x.dtype
    assert bool(jnp.array_equal(y, x))

    # Zero-cost pass-through (the real optimization: no kernel, no HBM traffic).
    y_fast = model_base_forward(x, materialize=False)
    assert y_fast is x

    # Fallback path: element count not a multiple of 128.
    x_odd = jax.random.normal(jax.random.PRNGKey(1), (3, 5, 7), dtype=jnp.float32)
    y_odd = jax.block_until_ready(_pallas_identity_copy(x_odd))
    assert bool(jnp.array_equal(y_odd, x_odd))

    # ModelBase has no parameters.
    assert list(trainable_parameters({})) == []

    print("KERNEL_OK")
</pallas_src>

<mosaic_0001>
module attributes {stable_mosaic.version = 11 : i64} {
  func.func @_copy_kernel(%arg0: i32, %arg1: memref<1x2048xf32, #tpu.memory_space<vmem>>, %arg2: memref<1x2048xf32, #tpu.memory_space<vmem>>) attributes {dimension_semantics = [#tpu.dimension_semantics<parallel>], iteration_bounds = array<i64: 1>, scalar_prefetch = 0 : i64, scratch_operands = 0 : i64, tpu.core_type = #tpu.core_type<tc>, window_params = [{transform_indices = @transform_0, window_bounds = array<i64: 1, 2048>}, {transform_indices = @transform_1, window_bounds = array<i64: 1, 2048>}]} {
    %c0 = arith.constant 0 : index
    %c0_0 = arith.constant 0 : index
    %0 = vector.load %arg1[%c0, %c0_0] : memref<1x2048xf32, #tpu.memory_space<vmem>>, vector<1x2048xf32>
    %c0_1 = arith.constant 0 : index
    %c0_2 = arith.constant 0 : index
    %1 = vector.load %arg2[%c0_1, %c0_2] : memref<1x2048xf32, #tpu.memory_space<vmem>>, vector<1x2048xf32>
    tpu.vector_store %arg2[%c0_1, %c0_2], %0 {strides = array<i32>} : memref<1x2048xf32, #tpu.memory_space<vmem>>, vector<1x2048xf32>,
    return
  }
  func.func @transform_0(%arg0: i32) -> (i32, i32) {
    %c0_i32 = arith.constant 0 : i32
    %c0_i32_0 = arith.constant 0 : i32
    return %arg0, %c0_i32 : i32, i32
  }
  func.func @transform_1(%arg0: i32) -> (i32, i32) {
    %c0_i32 = arith.constant 0 : i32
    %c0_i32_0 = arith.constant 0 : i32
    return %arg0, %c0_i32 : i32, i32
  }
}

</mosaic_0001>

<llo_original>
// kernel: tpu_custom_call.1
$region0: #{tpu_custom_call.1}
  #allocation0 [shape = 'u32[]', space=smem, size = 0x4, offset = 0x4, fixed_abs, tag = 'smem constant byte address 0x4 - core index']
  #allocation1 [shape = 'u32[144,128]{1,0:T(1,128)}', space=vmem, size = 0x12000, scoped, tag = 'internal scratch']
  %s0 = inlined_call_operand.hbm [shape: f32[1,2048], index: 0, kind: input, shape index: {}]
  %s1 = inlined_call_operand.hbm [shape: f32[1,2048], index: 1, kind: output, shape index: {}]
  %s2 = sld [smem:[#allocation0]]
  $region18: #{tpu_custom_call.1} parent=0
    _
  %s4 = ssub.s32 1, %s2
  %s5 = scalar_select 0, %s4, %s2
  $region1: #{tpu_custom_call.1} parent=0
    #allocation2 [shape = 'u8[8192]{0}', space=vmem, size = 0x2000, scoped, tag = 'input window, operand 0, single buffered']
    #allocation3 [shape = 's32[1]{0}', space=sflag, size = 0x4, scoped, tag = 'scoped memory for tpu_custom_call.1']
    #allocation4 [shape = 's32[1]{0}', space=sflag, size = 0x4, scoped, tag = 'scoped memory for tpu_custom_call.1']
    #allocation5 [shape = 'u8[8192]{0}', space=vmem, size = 0x2000, scoped, tag = 'output window, operand 0, single buffered']
    %6 = vsyncpa [#allocation3], 0
    %7 = vsyncpa [#allocation4], 0
    // Predicated region
    $region2: #{tpu_custom_call.1} parent=1 // pred_check
      _
    $region3: #{tpu_custom_call.1} parent=1 // pred_check_branch
      %9 = sbr.rel (0) target = $region5
    $region4: #{tpu_custom_call.1} parent=1 // pred_region
      %s11 = ssub.s32 256, 256
      %12 = vsyncadd [#allocation3], %s11
      %s14 = sshll.u32 [#allocation2], 4
      %s15 = int_to_ptr.vmem [resolvable:$true] %s14
      %17 = dma.hbm_to_vmem [thread:$0]  %s0, 256, %s15, [#allocation3]
    $region5: #{tpu_custom_call.1} parent=1 // pred_fallthru
      _
    // Predicated region
    $region6: #{tpu_custom_call.1} parent=1 // pred_check
      _
    $region7: #{tpu_custom_call.1} parent=1 // pred_check_branch
      %19 = sbr.rel (0) target = $region9
    $region8: #{tpu_custom_call.1} parent=1 // pred_region
      %20 = dma.done [#allocation3], 256
    $region9: #{tpu_custom_call.1} parent=1 // pred_fallthru
      _
    %v21 = vld [vmem:[#allocation2] sm:$0xff]
    %v22 = vld [vmem:[#allocation2 + $0x8] sm:$0xff]
    %23 = vst [vmem:[#allocation5] sm:$0xff] %v21
    %24 = vst [vmem:[#allocation5 + $0x8] sm:$0xff] %v22
    // Predicated region
    $region10: #{tpu_custom_call.1} parent=1 // pred_check
      _
    $region11: #{tpu_custom_call.1} parent=1 // pred_check_branch
      %26 = sbr.rel (0) target = $region13
    $region12: #{tpu_custom_call.1} parent=1 // pred_region
      %s28 = ssub.s32 256, 256
      %29 = vsyncadd [#allocation4], %s28
      %s31 = sshll.u32 [#allocation5], 4
      %s32 = int_to_ptr.vmem [resolvable:$true] %s31
      %34 = dma.vmem_to_hbm [thread:$0]  %s32, 256, %s1, [#allocation4]
    $region13: #{tpu_custom_call.1} parent=1 // pred_fallthru
      _
    // Predicated region
    $region14: #{tpu_custom_call.1} parent=1 // pred_check
      _
    $region15: #{tpu_custom_call.1} parent=1 // pred_check_branch
      %36 = sbr.rel (0) target = $region17
    $region16: #{tpu_custom_call.1} parent=1 // pred_region
      %37 = dma.done [#allocation4], 256
    $region17: #{tpu_custom_call.1} parent=1 // pred_fallthru
      _
    %38 = vsyncpa [#allocation3], 1
    %39 = vsyncpa [#allocation4], 1

</llo_original>
